<compile_context>
chip_gen: v7x
topology: tpu7x:2x2x1
jax: 0.10.0
libtpu: 0.0.40
codegen_flags: <defaults>
</compile_context>

<pallas_src>
import functools

import jax
import jax.numpy as jnp
from jax.experimental import pallas as pl
from jax.experimental.pallas import tpu as pltpu


def inv_sigmoid(x):
    """Inverse of the sigmoid function (matches the PyTorch helper)."""
    return -jnp.log(1.0 / x - 1.0)


def _round_up(v: int, m: int) -> int:
    return (v + m - 1) // m * m


# ---------------------------------------------------------------------------
# Kernels
# ---------------------------------------------------------------------------

def _skip_kernel_resident(g_ref, x_ref, w_ref, b_ref, o_ref, *, balance: bool):
    """Weight fully VMEM-resident; 1-D grid over row tiles.

    g_ref : (1, 1)    SMEM, POST-sigmoid gate value g
    x_ref : (tm, Hp)  input row tile — matmul LHS *and* skip path (deduped)
    w_ref : (Hp, Hp)  full weight (in, out), constant index map -> DMA'd once
    b_ref : (1, Hp)   bias (f32)
    o_ref : (tm, Hp)  output tile
    """
    g = g_ref[0, 0]
    x = x_ref[...]
    fn_x = jnp.dot(x, w_ref[...], preferred_element_type=jnp.float32) + b_ref[...]
    x_skip = x.astype(jnp.float32)
    if balance:
        out = x_skip * (1.0 - g) + fn_x * g
    else:
        out = x_skip * (1.0 - g) + fn_x
    o_ref[...] = out.astype(o_ref.dtype)


def _skip_kernel_streamed(g_ref, x_ref, w_ref, b_ref, o_ref, *,
                          balance: bool, tn: int):
    """Weight streamed in (Hp, tn) column tiles; grid = (N tiles, M tiles).

    The weight-column axis is the OUTER grid axis and the weight index map
    depends only on it, so each weight tile is DMA'd exactly once (weight
    streamed once in total); the LHS row tile is what re-streams (Hp/tn x).
    The skip tile is sliced from the already-resident LHS tile (no second
    HBM read of x).
    """
    g = g_ref[0, 0]
    j = pl.program_id(0)                      # output-column (weight) tile index
    x = x_ref[...]
    fn_x = jnp.dot(x, w_ref[...], preferred_element_type=jnp.float32) + b_ref[...]
    col0 = pl.multiple_of(j * tn, 128)        # lane-tile aligned column offset
    x_skip = x_ref[:, pl.ds(col0, tn)].astype(jnp.float32)
    if balance:
        out = x_skip * (1.0 - g) + fn_x * g
    else:
        out = x_skip * (1.0 - g) + fn_x
    o_ref[...] = out.astype(o_ref.dtype)


# ---------------------------------------------------------------------------
# Wrapper
# ---------------------------------------------------------------------------

def learnable_skip_connection(x, w, b, gate, *, balance: bool = False,
                              tm: int = 256, mxu_dtype=jnp.bfloat16,
                              weight_resident=None, tn=None):
    """x: [B, S, H]; w: [H, H] (in, out); b: [H]; gate: [1] pre-activation.

    mxu_dtype: dtype of the matmul operands AND the in-kernel copy of x
      (bf16 default: halves x/W DMA; accumulate, bias add and the gated skip
      combine are always f32). mxu_dtype=None keeps x/W in x's dtype (exact
      f32 path, f32 residual).
    weight_resident: None = auto (based on device VMEM capacity);
      True  -> keep the full (Hp, Hp) weight VMEM-resident (v5e/v6e style);
      False -> stream (Hp, tn) weight column tiles once (v7x style).
    tn: streamed-path weight column tile (multiple of 128 dividing Hp).
    """
    B, S, H = x.shape
    M = B * S
    x2 = x.reshape(M, H)
    out_dtype = x.dtype

    kdtype = jnp.dtype(x.dtype) if mxu_dtype is None else jnp.dtype(mxu_dtype)

    # ---- tiling: lane-dense H (pad to multiple of 128), large row tile ----
    Hp = _round_up(H, 128)
    align = 8 if kdtype.itemsize >= 4 else 16
    tm_eff = _round_up(min(tm, _round_up(M, align)), align)

    # ---- operands: pad ONLY the H/K dim (true zeros needed in contraction);
    #      M is handled by a cdiv grid with a partial last tile (no x copy). --
    if Hp != H:
        x_use = jnp.zeros((M, Hp), kdtype).at[:, :H].set(x2.astype(kdtype))
    elif kdtype != x2.dtype:
        x_use = x2.astype(kdtype)
    else:
        x_use = x2
    w_use = w.astype(kdtype)
    if Hp != H:
        w_use = jnp.zeros((Hp, Hp), kdtype).at[:H, :H].set(w_use)
    b_use = jnp.zeros((1, Hp), jnp.float32).at[0, :H].set(b.astype(jnp.float32))

    # Gate sigmoid hoisted out of the kernel (computed once, passed via SMEM).
    g_val = jax.nn.sigmoid(gate.astype(jnp.float32)).reshape(1, 1)

    x_bytes = kdtype.itemsize
    w_bytes = kdtype.itemsize
    out_bytes = jnp.dtype(out_dtype).itemsize

    # ---- generation-aware VMEM budget (~25% headroom) ----
    try:
        vmem_cap = int(pltpu.get_tpu_info().vmem_capacity_bytes)
    except Exception:
        vmem_cap = 64 << 20  # conservative (v7x per-core VMEM)
    budget = (vmem_cap * 3) // 4
    margin = 2 << 20

    # Footprint with the weight fully resident (counted double-buffered to be
    # conservative; its constant index map means it is only DMA'd once).
    resident_bytes = (2 * tm_eff * Hp * x_bytes
                      + 2 * Hp * Hp * w_bytes
                      + 2 * Hp * 4
                      + 2 * tm_eff * Hp * out_bytes
                      + margin)

    if weight_resident is None:
        weight_resident = resident_bytes <= budget

    if weight_resident:
        # ---------------- resident-weight layout (v5e / v6e) ----------------
        kernel = functools.partial(_skip_kernel_resident, balance=balance)
        num_m = pl.cdiv(M, tm_eff)
        grid = (num_m,)
        in_specs = [
            pl.BlockSpec((1, 1), lambda i: (0, 0),
                         memory_space=pltpu.MemorySpace.SMEM),   # gate g
            pl.BlockSpec((tm_eff, Hp), lambda i: (i, 0)),        # x (LHS + skip)
            pl.BlockSpec((Hp, Hp), lambda i: (0, 0)),            # W (resident)
            pl.BlockSpec((1, Hp), lambda i: (0, 0)),             # bias
        ]
        out_specs = pl.BlockSpec((tm_eff, Hp), lambda i: (i, 0))
        dims = ("parallel",)
        footprint = resident_bytes
        bytes_accessed = (M * Hp * x_bytes + Hp * Hp * w_bytes
                          + Hp * 4 + M * Hp * out_bytes)
    else:
        # ---------------- streamed-weight layout (v7x) ----------------------
        if tn is not None:
            assert Hp % tn == 0 and tn % 128 == 0, "tn must be a 128-multiple dividing Hp"
            tn_eff = tn
        else:
            tn_eff = None
            for cand in (512, 256, 128):
                if Hp % cand:
                    continue
                nb = (2 * tm_eff * Hp * x_bytes + 2 * Hp * cand * w_bytes
                      + 2 * cand * 4 + 2 * tm_eff * cand * out_bytes + margin)
                if nb <= budget:
                    tn_eff = cand
                    break
            if tn_eff is None:
                tn_eff = 128
                # shrink the row tile until the LHS tile fits the budget
                while tm_eff > align:
                    nb = (2 * tm_eff * Hp * x_bytes + 2 * Hp * tn_eff * w_bytes
                          + 2 * tn_eff * 4 + 2 * tm_eff * tn_eff * out_bytes + margin)
                    if nb <= budget:
                        break
                    tm_eff = max(align, _round_up(tm_eff // 2, align))
        num_m = pl.cdiv(M, tm_eff)
        kernel = functools.partial(_skip_kernel_streamed, balance=balance, tn=tn_eff)
        grid = (Hp // tn_eff, num_m)  # (weight-column tiles OUTER, row tiles inner)
        in_specs = [
            pl.BlockSpec((1, 1), lambda j, i: (0, 0),
                         memory_space=pltpu.MemorySpace.SMEM),   # gate g
            pl.BlockSpec((tm_eff, Hp), lambda j, i: (i, 0)),     # x (LHS + skip)
            pl.BlockSpec((Hp, tn_eff), lambda j, i: (0, j)),     # W column tile
            pl.BlockSpec((1, tn_eff), lambda j, i: (0, j)),      # bias tile
        ]
        out_specs = pl.BlockSpec((tm_eff, tn_eff), lambda j, i: (i, j))
        dims = ("arbitrary", "parallel")   # rows split across TensorCores
        footprint = (2 * tm_eff * Hp * x_bytes + 2 * Hp * tn_eff * w_bytes
                     + 2 * tn_eff * 4 + 2 * tm_eff * tn_eff * out_bytes + margin)
        bytes_accessed = ((Hp // tn_eff) * M * Hp * x_bytes + Hp * Hp * w_bytes
                          + Hp * 4 + M * Hp * out_bytes)

    vmem_limit = int(min(max(footprint + (4 << 20), 16 << 20), (vmem_cap * 9) // 10))

    cost = pl.CostEstimate(
        flops=int(2 * M * Hp * Hp + 4 * M * Hp),
        transcendentals=0,
        bytes_accessed=int(bytes_accessed),
    )

    out = pl.pallas_call(
        kernel,
        out_shape=jax.ShapeDtypeStruct((M, Hp), out_dtype),
        grid_spec=pltpu.PrefetchScalarGridSpec(
            num_scalar_prefetch=0,
            grid=grid,
            in_specs=in_specs,
            out_specs=out_specs,
        ),
        compiler_params=pltpu.CompilerParams(
            dimension_semantics=dims,
            vmem_limit_bytes=vmem_limit,
        ),
        cost_estimate=cost,
    )(g_val, x_use, w_use, b_use)

    if Hp != H:
        out = out[:, :H]
    return out.reshape(B, S, H)


def reference(x, w, b, gate, *, balance: bool = False):
    g = jax.nn.sigmoid(gate.reshape(()))
    fn_x = jnp.einsum("bsh,ho->bso", x, w) + b
    if balance:
        return x * (1.0 - g) + fn_x * g
    return x * (1.0 - g) + fn_x


if __name__ == "__main__":
    key = jax.random.PRNGKey(0)

    def make_inputs(B, S, H):
        kx, kw, kb = jax.random.split(jax.random.fold_in(key, 1000 * H + S), 3)
        x = jax.random.normal(kx, (B, S, H), dtype=jnp.float32)
        # Deterministic "fn" (Linear(H, H)) parameters (weight stored (in, out)).
        w = jax.random.normal(kw, (H, H), dtype=jnp.float32) * 0.02
        b = jax.random.normal(kb, (H,), dtype=jnp.float32) * 0.01
        # Gate initialized exactly as the module: inv_sigmoid(0.05).
        gate = jnp.full((1,), inv_sigmoid(jnp.float32(0.05)), dtype=jnp.float32)
        return x, w, b, gate

    # 1) exact-semantics path: f32 operands, resident weight, tight tolerance.
    x, w, b, gate = make_inputs(2, 8, 32)
    ref = reference(x, w, b, gate, balance=False)
    out_f32 = jax.block_until_ready(
        learnable_skip_connection(x, w, b, gate, balance=False, mxu_dtype=None))
    assert jnp.allclose(out_f32, ref, atol=1e-5, rtol=1e-5), "mismatch (f32 resident)"

    # 2) default fast path: bf16 MXU operands + bf16 x read (residual rounds to
    #    bf16 — intentional, reflected in the tolerance), f32 accumulate/combine.
    out_bf16 = jax.block_until_ready(
        learnable_skip_connection(x, w, b, gate, balance=False))
    assert jnp.allclose(out_bf16, ref, atol=2e-2, rtol=2e-2), "mismatch (bf16 resident)"

    # 3) balance=True branch.
    ref_bal = reference(x, w, b, gate, balance=True)
    out_bal = jax.block_until_ready(
        learnable_skip_connection(x, w, b, gate, balance=True))
    assert jnp.allclose(out_bal, ref_bal, atol=2e-2, rtol=2e-2), "mismatch (balance)"

    # 4) ragged M (exercises the cdiv grid / partial row tile — no padded x copy).
    xr, wr, br, gr = make_inputs(2, 7, 32)          # M = 14, not a tile multiple
    refr = reference(xr, wr, br, gr, balance=False)
    outr = jax.block_until_ready(
        learnable_skip_connection(xr, wr, br, gr, balance=False, mxu_dtype=None))
    assert jnp.allclose(outr, refr, atol=1e-5, rtol=1e-5), "mismatch (ragged M)"

    # 5) streamed-weight path (v7x-style grid: weight column tiles outer, rows inner,
    #    skip tile sliced out of the resident LHS tile with a dynamic lane slice).
    xs, ws, bs, gs = make_inputs(2, 8, 256)
    refs = reference(xs, ws, bs, gs, balance=False)
    outs = jax.block_until_ready(
        learnable_skip_connection(xs, ws, bs, gs, balance=False, mxu_dtype=None,
                                  weight_resident=False, tn=128))
    assert jnp.allclose(outs, refs, atol=1e-4, rtol=1e-4), "mismatch (streamed W)"

    print("KERNEL_OK")
</pallas_src>

<mosaic_0001>
module attributes {stable_mosaic.version = 11 : i64} {
  func.func @_skip_kernel_resident(%arg0: i32, %arg1: memref<1x1xf32, #tpu.memory_space<smem>>, %arg2: memref<16x128xf32, #tpu.memory_space<vmem>>, %arg3: memref<128x128xf32, #tpu.memory_space<vmem>>, %arg4: memref<1x128xf32, #tpu.memory_space<vmem>>, %arg5: memref<16x128xf32, #tpu.memory_space<vmem>>) attributes {dimension_semantics = [#tpu.dimension_semantics<parallel>], iteration_bounds = array<i64: 1>, scalar_prefetch = 0 : i64, scratch_operands = 0 : i64, tpu.core_type = #tpu.core_type<tc>, window_params = [{transform_indices = @transform_0, window_bounds = array<i64: 1, 1>}, {transform_indices = @transform_1, window_bounds = array<i64: 16, 128>}, {pipeline_mode = #tpu.pipeline_mode<synchronous>, transform_indices = @transform_2, window_bounds = array<i64: 128, 128>}, {pipeline_mode = #tpu.pipeline_mode<synchronous>, transform_indices = @transform_3, window_bounds = array<i64: 1, 128>}, {transform_indices = @transform_4, window_bounds = array<i64: 16, 128>}]} {
    %c0 = arith.constant 0 : index
    %c0_0 = arith.constant 0 : index
    %0 = memref.load %arg1[%c0, %c0_0] : memref<1x1xf32, #tpu.memory_space<smem>>
    %c0_1 = arith.constant 0 : index
    %c0_2 = arith.constant 0 : index
    %1 = vector.load %arg2[%c0_1, %c0_2] : memref<16x128xf32, #tpu.memory_space<vmem>>, vector<16x128xf32>
    %c0_3 = arith.constant 0 : index
    %c0_4 = arith.constant 0 : index
    %2 = vector.load %arg3[%c0_3, %c0_4] : memref<128x128xf32, #tpu.memory_space<vmem>>, vector<128x128xf32>
    %cst = arith.constant dense<0.000000e+00> : vector<16x128xf32>
    %3 = tpu.matmul %1, %2, %cst {dimension_numbers = #tpu.dot_dimension_numbers<[1], [0], [0], [1], [0, 0, 1, 1], [], []>} : vector<16x128xf32>, vector<128x128xf32>, vector<16x128xf32> -> vector<16x128xf32>
    %c0_5 = arith.constant 0 : index
    %c0_6 = arith.constant 0 : index
    %4 = vector.load %arg4[%c0_5, %c0_6] : memref<1x128xf32, #tpu.memory_space<vmem>>, vector<1x128xf32>
    %5 = vector.broadcast %4 : vector<1x128xf32> to vector<16x128xf32>
    %6 = arith.addf %3, %5 : vector<16x128xf32>
    %cst_7 = arith.constant 1.000000e+00 : f32
    %7 = arith.subf %cst_7, %0 : f32
    %8 = vector.broadcast %7 : f32 to vector<16x128xf32>
    %9 = arith.mulf %1, %8 : vector<16x128xf32>
    %10 = arith.addf %9, %6 : vector<16x128xf32>
    %c0_8 = arith.constant 0 : index
    %c0_9 = arith.constant 0 : index
    %11 = vector.load %arg5[%c0_8, %c0_9] : memref<16x128xf32, #tpu.memory_space<vmem>>, vector<16x128xf32>
    tpu.vector_store %arg5[%c0_8, %c0_9], %10 {strides = array<i32>} : memref<16x128xf32, #tpu.memory_space<vmem>>, vector<16x128xf32>,
    return
  }
  func.func @transform_0(%arg0: i32) -> (i32, i32) {
    %c0_i32 = arith.constant 0 : i32
    %c0_i32_0 = arith.constant 0 : i32
    %c0_i32_1 = arith.constant 0 : i32
    return %c0_i32, %c0_i32_0 : i32, i32
  }
  func.func @transform_1(%arg0: i32) -> (i32, i32) {
    %c0_i32 = arith.constant 0 : i32
    %c0_i32_0 = arith.constant 0 : i32
    return %arg0, %c0_i32 : i32, i32
  }
  func.func @transform_2(%arg0: i32) -> (i32, i32) {
    %c0_i32 = arith.constant 0 : i32
    %c0_i32_0 = arith.constant 0 : i32
    %c0_i32_1 = arith.constant 0 : i32
    return %c0_i32, %c0_i32_0 : i32, i32
  }
  func.func @transform_3(%arg0: i32) -> (i32, i32) {
    %c0_i32 = arith.constant 0 : i32
    %c0_i32_0 = arith.constant 0 : i32
    %c0_i32_1 = arith.constant 0 : i32
    return %c0_i32, %c0_i32_0 : i32, i32
  }
  func.func @transform_4(%arg0: i32) -> (i32, i32) {
    %c0_i32 = arith.constant 0 : i32
    %c0_i32_0 = arith.constant 0 : i32
    return %arg0, %c0_i32 : i32, i32
  }
}

</mosaic_0001>

<llo_original>
// kernel: tpu_custom_call.1
$region0: #{tpu_custom_call.1}
  #allocation0 [shape = 'u32[]', space=smem, size = 0x4, offset = 0x4, fixed_abs, tag = 'smem constant byte address 0x4 - core index']
  #allocation1 [shape = 'u32[144,128]{1,0:T(1,128)}', space=vmem, size = 0x12000, scoped, tag = 'internal scratch']
  #allocation2 [shape = 'f32[1,1]{1,0:T(1,128)S(6)}', space=smem, size = 0x200, scoped, tag = 'scoped memory for tpu_custom_call.1']
  %s0 = inlined_call_operand.<no memory space> [shape: f32[1,1], index: 0, kind: input, shape index: {}]
  %s1 = inlined_call_operand.hbm [shape: f32[16,128], index: 1, kind: input, shape index: {}]
  %s2 = inlined_call_operand.hbm [shape: f32[128,128], index: 2, kind: input, shape index: {}]
  %s3 = inlined_call_operand.vmem [shape: f32[1,128], index: 3, kind: input, shape index: {}]
  %s4 = inlined_call_operand.hbm [shape: f32[16,128], index: 4, kind: output, shape index: {}]
  %s5 = sld [smem:[#allocation0]]
  $region34: #{tpu_custom_call.1} parent=0
    _
  %s7 = ssub.s32 1, %s5
  %s8 = scalar_select 0, %s7, %s5
  %9 = sst [smem:[#allocation2]] %s0
  $region1: #{tpu_custom_call.1} parent=0
    #allocation3 [shape = 'u8[8192]{0}', space=vmem, size = 0x2000, scoped, tag = 'input window, operand 1, single buffered']
    #allocation4 [shape = 's32[1]{0}', space=sflag, size = 0x4, scoped, tag = 'scoped memory for tpu_custom_call.1']
    #allocation5 [shape = 's32[1]{0}', space=sflag, size = 0x4, scoped, tag = 'scoped memory for tpu_custom_call.1']
    #allocation6 [shape = 'u8[65536]{0}', space=vmem, size = 0x10000, scoped, tag = 'input window, operand 2, single buffered']
    #allocation7 [shape = 's32[1]{0}', space=sflag, size = 0x4, scoped, tag = 'scoped memory for tpu_custom_call.1']
    #allocation8 [shape = 'u8[8192]{0}', space=vmem, size = 0x2000, scoped, tag = 'output window, operand 0, single buffered']
    %10 = vsyncpa [#allocation4], 0
    %11 = vsyncpa [#allocation7], 0
    %12 = vsyncpa [#allocation5], 0
    // Predicated region
    $region2: #{tpu_custom_call.1} parent=1 // pred_check
      _
    $region3: #{tpu_custom_call.1} parent=1 // pred_check_branch
      %14 = sbr.rel (0) target = $region5
    $region4: #{tpu_custom_call.1} parent=1 // pred_region
      _
    $region5: #{tpu_custom_call.1} parent=1 // pred_fallthru
      _
    // Predicated region
    $region6: #{tpu_custom_call.1} parent=1 // pred_check
      _
    $region7: #{tpu_custom_call.1} parent=1 // pred_check_branch
      %16 = sbr.rel (0) target = $region9
    $region8: #{tpu_custom_call.1} parent=1 // pred_region
      %s18 = ssub.s32 256, 256
      %19 = vsyncadd [#allocation4], %s18
      %s20 = sshll.u32 [#allocation3], 4
      %s21 = int_to_ptr.vmem [resolvable:$true] %s20
      %26 = dma.hbm_to_vmem [thread:$0]  %s1, 256, %s21, [#allocation4], 128, 128, 8
    $region9: #{tpu_custom_call.1} parent=1 // pred_fallthru
      _
    // Predicated region
    $region10: #{tpu_custom_call.1} parent=1 // pred_check
      _
    $region11: #{tpu_custom_call.1} parent=1 // pred_check_branch
      %28 = sbr.rel (0) target = $region13
    $region12: #{tpu_custom_call.1} parent=1 // pred_region
      %s30 = ssub.s32 2048, 2048
      %31 = vsyncadd [#allocation7], %s30
      %s32 = sshll.u32 [#allocation6], 4
      %s33 = int_to_ptr.vmem [resolvable:$true] %s32
      %38 = dma.hbm_to_vmem [thread:$0]  %s2, 2048, %s33, [#allocation7], 128, 128, 8
    $region13: #{tpu_custom_call.1} parent=1 // pred_fallthru
      _
    // Predicated region
    $region14: #{tpu_custom_call.1} parent=1 // pred_check
      _
    $region15: #{tpu_custom_call.1} parent=1 // pred_check_branch
      %40 = sbr.rel (0) target = $region17
    $region16: #{tpu_custom_call.1} parent=1 // pred_region
      _
    $region17: #{tpu_custom_call.1} parent=1 // pred_fallthru
      _
    // Predicated region
    $region18: #{tpu_custom_call.1} parent=1 // pred_check
      _
    $region19: #{tpu_custom_call.1} parent=1 // pred_check_branch
      %42 = sbr.rel (0) target = $region21
    $region20: #{tpu_custom_call.1} parent=1 // pred_region
      %43 = dma.done [#allocation4], 256
    $region21: #{tpu_custom_call.1} parent=1 // pred_fallthru
      _
    // Predicated region
    $region22: #{tpu_custom_call.1} parent=1 // pred_check
      _
    $region23: #{tpu_custom_call.1} parent=1 // pred_check_branch
      %45 = sbr.rel (0) target = $region25
    $region24: #{tpu_custom_call.1} parent=1 // pred_region
      %46 = dma.done [#allocation7], 2048
    $region25: #{tpu_custom_call.1} parent=1 // pred_fallthru
      _
    %s47 = sld [smem:[#allocation2]]
    %v48 = vld [vmem:[#allocation3] sm:$0xff]
    %v49 = vld [vmem:[#allocation3 + $0x8] sm:$0xff]
    %v50 = vld [vmem:[#allocation6] sm:$0xff]
    %v51 = vld [vmem:[#allocation6 + $0x8] sm:$0xff]
    %v52 = vld [vmem:[#allocation6 + $0x10] sm:$0xff]
    %v53 = vld [vmem:[#allocation6 + $0x18] sm:$0xff]
    %v54 = vld [vmem:[#allocation6 + $0x20] sm:$0xff]
    %v55 = vld [vmem:[#allocation6 + $0x28] sm:$0xff]
    %v56 = vld [vmem:[#allocation6 + $0x30] sm:$0xff]
    %v57 = vld [vmem:[#allocation6 + $0x38] sm:$0xff]
    %v58 = vld [vmem:[#allocation6 + $0x40] sm:$0xff]
    %v59 = vld [vmem:[#allocation6 + $0x48] sm:$0xff]
    %v60 = vld [vmem:[#allocation6 + $0x50] sm:$0xff]
    %v61 = vld [vmem:[#allocation6 + $0x58] sm:$0xff]
    %v62 = vld [vmem:[#allocation6 + $0x60] sm:$0xff]
    %v63 = vld [vmem:[#allocation6 + $0x68] sm:$0xff]
    %v64 = vld [vmem:[#allocation6 + $0x70] sm:$0xff]
    %v65 = vld [vmem:[#allocation6 + $0x78] sm:$0xff]
    %v66 = vld [vmem:[%s3] sm:$0x1]
    %v68 = vlaneseq
    %v69 = vshrl.u32 %v68, 7
    %v70 = vsub.s32 0, %v69
    %v71 = vrot.slane %v66, %v70
    %73 = vmatprep.subr.mxu0 0.0
    %74 = vmatpush1.msra.mxu0 %v50
    %75 = vmatprep.subr.mxu0 0.0
    %76 = vmatpush1.msra.mxu0 %v51
    %77 = vmatprep.subr.mxu0 0.0
    %78 = vmatpush1.msra.mxu0 %v52
    %79 = vmatprep.subr.mxu0 0.0
    %80 = vmatpush1.msra.mxu0 %v53
    %81 = vmatprep.subr.mxu0 0.0
    %82 = vmatpush1.msra.mxu0 %v54
    %83 = vmatprep.subr.mxu0 0.0
    %84 = vmatpush1.msra.mxu0 %v55
    %85 = vmatprep.subr.mxu0 0.0
    %86 = vmatpush1.msra.mxu0 %v56
    %87 = vmatprep.subr.mxu0 0.0
    %88 = vmatpush1.msra.mxu0 %v57
    %89 = vmatprep.subr.mxu0 0.0
    %90 = vmatpush1.msra.mxu0 %v58
    %91 = vmatprep.subr.mxu0 0.0
    %92 = vmatpush1.msra.mxu0 %v59
    %93 = vmatprep.subr.mxu0 0.0
    %94 = vmatpush1.msra.mxu0 %v60
    %95 = vmatprep.subr.mxu0 0.0
    %96 = vmatpush1.msra.mxu0 %v61
    %97 = vmatprep.subr.mxu0 0.0
    %98 = vmatpush1.msra.mxu0 %v62
    %99 = vmatprep.subr.mxu0 0.0
    %100 = vmatpush1.msra.mxu0 %v63
    %101 = vmatprep.subr.mxu0 0.0
    %102 = vmatpush1.msra.mxu0 %v64
    %103 = vmatprep.subr.mxu0 0.0
    %104 = vmatpush1.msra.mxu0 %v65
    %105 = vmatprep.subr.mxu0 0.0
    %106 = vmatpush1.msra.mxu0 0.0
    %107 = vmatprep.subr.mxu0 0.0
    %108 = vmatpush1.msra.mxu0 0.0
    %109 = vmatprep.subr.mxu0 0.0
    %110 = vmatpush1.msra.mxu0 0.0
    %111 = vmatprep.subr.mxu0 0.0
    %112 = vmatpush1.msra.mxu0 0.0
    %113 = vmatprep.subr.mxu0 0.0
    %114 = vmatpush1.msra.mxu0 0.0
    %115 = vmatprep.subr.mxu0 0.0
    %116 = vmatpush1.msra.mxu0 0.0
    %117 = vmatprep.subr.mxu0 0.0
    %118 = vmatpush1.msra.mxu0 0.0
    %119 = vmatprep.subr.mxu0 0.0
    %120 = vmatpush1.msra.mxu0 0.0
    %121 = vmatprep.subr.mxu0 0.0
    %122 = vmatpush1.msra.mxu0 0.0
    %123 = vmatprep.subr.mxu0 0.0
    %124 = vmatpush1.msra.mxu0 0.0
    %125 = vmatprep.subr.mxu0 0.0
    %126 = vmatpush1.msra.mxu0 0.0
    %127 = vmatprep.subr.mxu0 0.0
    %128 = vmatpush1.msra.mxu0 0.0
    %129 = vmatprep.subr.mxu0 0.0
    %130 = vmatpush1.msra.mxu0 0.0
    %131 = vmatprep.subr.mxu0 0.0
    %132 = vmatpush1.msra.mxu0 0.0
    %133 = vmatprep.subr.mxu0 0.0
    %134 = vmatpush1.msra.mxu0 0.0
    %135 = vmatprep.subr.mxu0 0.0
    %136 = vmatpush1.msra.mxu0 0.0
    %137 = vmatprep.mubr.f32.mxu0 0.0
    %138 = vmatmul.mubr.f32.gmra.mrb[0].mxu0 %v48
    %v139 = vpop.f32.mrb[0].mxu0
    %v140 = vadd.f32 %v71, %v139
    %v141 = vpop.f32.mrb[0].mxu0
    %142 = vmatprep.mubr.f32.mxu0 0.0
    %143 = vmatmul.mubr.f32.gmra.mrb[0].mxu0 %v49
    %v144 = vpop.f32.mrb[0].mxu0
    %v145 = vadd.f32 %v71, %v144
    %v146 = vpop.f32.mrb[0].mxu0
    %147 = vdwg.mxu0
    %s148 = ssub.f32 1.0, %s47
    %v149 = vstv %s148
    %v150 = vmul.f32 %v48, %v149
    %v151 = vmul.f32 %v49, %v149
    %v152 = vadd.f32 %v150, %v140
    %v153 = vadd.f32 %v151, %v145
    %154 = vst [vmem:[#allocation8] sm:$0xff] %v152
    %155 = vst [vmem:[#allocation8 + $0x8] sm:$0xff] %v153
    // Predicated region
    $region26: #{tpu_custom_call.1} parent=1 // pred_check
      _
    $region27: #{tpu_custom_call.1} parent=1 // pred_check_branch
      %157 = sbr.rel (0) target = $region29
    $region28: #{tpu_custom_call.1} parent=1 // pred_region
      %s159 = ssub.s32 256, 256
      %160 = vsyncadd [#allocation5], %s159
      %s161 = sshll.u32 [#allocation8], 4
      %s162 = int_to_ptr.vmem [resolvable:$true] %s161
      %167 = dma.vmem_to_hbm [thread:$0]  %s162, 256, %s4, [#allocation5], 128, 128, 8
    $region29: #{tpu_custom_call.1} parent=1 // pred_fallthru
      _
    // Predicated region
    $region30: #{tpu_custom_call.1} parent=1 // pred_check
      _
    $region31: #{tpu_custom_call.1} parent=1 // pred_check_branch
      %169 = sbr.rel (0) target = $region33
    $region32: #{tpu_custom_call.1} parent=1 // pred_region
      %170 = dma.done [#allocation5], 256
    $region33: #{tpu_custom_call.1} parent=1 // pred_fallthru
      _
    %171 = vsyncpa [#allocation4], 1
    %172 = vsyncpa [#allocation7], 1
    %173 = vsyncpa [#allocation5], 1

</llo_original>
